<compile_context>
chip_gen: v7x
topology: tpu7x:2x2x1
jax: 0.10.0
libtpu: 0.0.40
codegen_flags: <defaults>
</compile_context>

<pallas_src>
import functools

import jax
import jax.numpy as jnp
from jax.experimental import pallas as pl
from jax.experimental.pallas import tpu as pltpu


# ----------------------------------------------------------------------------
# Kernel
# ----------------------------------------------------------------------------
def rwkv_channel_mix_kernel(x_ref, xx_ref, tmk_ref, r_ref,
                            wk_ref, wv_ref, o_ref, xk_ref):
    f = pl.program_id(1)

    @pl.when(f == 0)
    def _init():
        # Time-mix computed once per M tile (hoisted out of the F loop).
        x = x_ref[...].astype(jnp.float32)      # (tm, C)
        xx = xx_ref[...].astype(jnp.float32)    # (tm, C) time-shifted x
        xk = xx + tmk_ref[...] * (x - xx)       # f32 mix
        xk_ref[...] = xk.astype(jnp.bfloat16)   # bf16 MXU operand, reused per F step
        o_ref[...] = jnp.zeros_like(o_ref)      # kv accumulated directly in o_ref

    # key path for this F tile: k = relu(xk @ Wk^T)^2 ; kv += k @ Wv^T
    k = jnp.dot(xk_ref[...], wk_ref[...], preferred_element_type=jnp.float32)
    k = jnp.maximum(k, 0.0)
    k = k * k
    o_ref[...] += jnp.dot(k.astype(jnp.bfloat16), wv_ref[...],
                          preferred_element_type=jnp.float32)

    @pl.when(f == pl.num_programs(1) - 1)
    def _finalize():
        # receptance gate (precomputed in the wrapper) applied once per M tile
        o_ref[...] = r_ref[...].astype(jnp.float32) * o_ref[...]


# ----------------------------------------------------------------------------
# Tiling / padding helpers (generation-aware)
# ----------------------------------------------------------------------------
def _round_up(n, m):
    return -(-n // m) * m


def _is_v7():
    try:
        return "v7" in jax.devices()[0].device_kind.lower()
    except Exception:  # pragma: no cover - defensive (e.g. CPU interpret mode)
        return False


def _vmem_limit_bytes(is_v7):
    # ~80% of physical per-TensorCore VMEM, leaving headroom for compiler
    # internal scratch (v7x has only 64 MiB; v5e/v6e have 128 MiB).
    physical = (64 if is_v7 else 128) * 1024 * 1024
    return (physical * 4) // 5


def _choose_m_tile(m, is_v7):
    """Row (M = B*T) tile: largest candidate that still yields >= 2 grid
    blocks (keeps both v7x TensorCores busy); M is padded to a tile multiple."""
    cands = (512, 256, 128) if is_v7 else (1024, 512, 256, 128)
    for c in cands:
        if m >= 2 * c:
            return c, _round_up(m, c)
    if m > 8:
        tm = _round_up(-(-m // 2), 8)   # two 8-aligned blocks
        return tm, 2 * tm
    return 8, _round_up(max(m, 1), 8)


def _choose_f_tile(f, is_v7):
    """F (dim_ffn) tile: lane dim of the Wk block / sublane dim of the Wv
    block -> multiple of 128; F is padded to a tile multiple (zeros are inert:
    relu(0)^2 @ 0 contributes nothing)."""
    cands = (512, 256, 128) if is_v7 else (1024, 512, 256, 128)
    for c in cands:
        if f >= c:
            return c, _round_up(f, c)
    n = _round_up(max(f, 1), 128)
    return n, n


def _pad_rows(a, n):
    if a.shape[0] == n:
        return a
    return jnp.pad(a, ((0, n - a.shape[0]), (0, 0)))


def _pad_cols(a, n):
    if a.shape[1] == n:
        return a
    return jnp.pad(a, ((0, 0), (0, n - a.shape[1])))


# ----------------------------------------------------------------------------
# Parameter prep (one-time, outside the hot path)
# ----------------------------------------------------------------------------
def prepare_weights(time_mix_k, time_mix_r, w_key, w_receptance, w_value):
    """Reshape mixes to (1, C) f32; transpose + cast Linear weights to bf16."""
    C = w_receptance.shape[0]
    tmk = jnp.asarray(time_mix_k, jnp.float32).reshape(1, C)
    tmr = jnp.asarray(time_mix_r, jnp.float32).reshape(1, C)
    wk_t = jnp.asarray(w_key, jnp.float32).T.astype(jnp.bfloat16)         # (C, F)
    wv_t = jnp.asarray(w_value, jnp.float32).T.astype(jnp.bfloat16)       # (F, C)
    wr_t = jnp.asarray(w_receptance, jnp.float32).T.astype(jnp.bfloat16)  # (C, C)
    return tmk, tmr, wk_t, wv_t, wr_t


# ----------------------------------------------------------------------------
# Forward wrapper
# ----------------------------------------------------------------------------
@functools.partial(jax.jit, static_argnames=("tm", "tf"))
def rwkv_channel_mix(x, tmk, tmr, wk_t, wv_t, wr_t, *, tm=None, tf=None):
    """x: (B, T, C); tmk/tmr: (1, C) f32; wk_t: (C, F) bf16; wv_t: (F, C) bf16;
    wr_t: (C, C) bf16.  Returns (B, T, C) f32."""
    B, T, C = x.shape
    F = wk_t.shape[1]
    M = B * T
    is_v7 = _is_v7()

    if tm is None:
        tm, m_pad = _choose_m_tile(M, is_v7)
    else:
        m_pad = _round_up(M, tm)
    if tf is None:
        tf, f_pad = _choose_f_tile(F, is_v7)
    else:
        f_pad = _round_up(F, tf)

    xf = x.astype(jnp.float32)
    # time_shift: xx[:, t] = x[:, t-1], xx[:, 0] = 0 — computed once here so
    # the flattened-M tiling inside the kernel never needs a halo row.
    xx = jnp.concatenate([jnp.zeros((B, 1, C), jnp.float32), xf[:, :-1, :]],
                         axis=1)

    # Receptance gate as a plain XLA GEMM (keeps (C, C) Wr out of kernel VMEM
    # and balances the F loop); passed to the kernel as a bf16 gate.
    dx2d = (xf - xx).reshape(M, C)
    xr2d = xx.reshape(M, C) + tmr * dx2d
    r2d = jax.nn.sigmoid(
        jnp.dot(xr2d.astype(jnp.bfloat16), wr_t,
                preferred_element_type=jnp.float32)).astype(jnp.bfloat16)

    # Stream activations as bf16; pad ragged M / F up to the tile multiples.
    x2d = _pad_rows(xf.reshape(M, C).astype(jnp.bfloat16), m_pad)
    xx2d = _pad_rows(xx.reshape(M, C).astype(jnp.bfloat16), m_pad)
    r2d = _pad_rows(r2d, m_pad)
    wk_p = _pad_cols(wk_t, f_pad)    # (C, F_pad)
    wv_p = _pad_rows(wv_t, f_pad)    # (F_pad, C)

    grid = (m_pad // tm, f_pad // tf)

    out2d = pl.pallas_call(
        rwkv_channel_mix_kernel,
        out_shape=jax.ShapeDtypeStruct((m_pad, C), jnp.float32),
        grid_spec=pltpu.PrefetchScalarGridSpec(
            num_scalar_prefetch=0,
            grid=grid,
            in_specs=[
                pl.BlockSpec((tm, C), lambda i, f: (i, 0)),   # x   (bf16)
                pl.BlockSpec((tm, C), lambda i, f: (i, 0)),   # xx  (bf16, shifted)
                pl.BlockSpec((1, C), lambda i, f: (0, 0)),    # time_mix_k (f32)
                pl.BlockSpec((tm, C), lambda i, f: (i, 0)),   # r gate (bf16)
                pl.BlockSpec((C, tf), lambda i, f: (0, f)),   # Wk^T tile (bf16)
                pl.BlockSpec((tf, C), lambda i, f: (f, 0)),   # Wv^T tile (bf16)
            ],
            out_specs=pl.BlockSpec((tm, C), lambda i, f: (i, 0)),
            scratch_shapes=[pltpu.VMEM((tm, C), jnp.bfloat16)],  # xk (per M tile)
        ),
        compiler_params=pltpu.CompilerParams(
            dimension_semantics=("parallel", "arbitrary"),
            vmem_limit_bytes=_vmem_limit_bytes(is_v7),
        ),
    )(x2d, xx2d, tmk, r2d, wk_p, wv_p)

    return out2d[:M].reshape(B, T, C)


# ----------------------------------------------------------------------------
# Synthetic params + pure-JAX reference (mirrors the torch module)
# ----------------------------------------------------------------------------
def make_params(n_embd, n_layer, dim_ffn, layer_id, key):
    ratio_1_to_almost0 = 1.0 - layer_id / n_layer
    ddd = (jnp.arange(n_embd, dtype=jnp.float32) / n_embd).reshape(1, 1, n_embd)
    time_mix_k = jnp.power(ddd, ratio_1_to_almost0)
    time_mix_r = jnp.power(ddd, ratio_1_to_almost0)
    k1, k2, k3 = jax.random.split(key, 3)
    w_key = jax.random.normal(k1, (dim_ffn, n_embd), jnp.float32) * 0.02
    w_receptance = jax.random.normal(k2, (n_embd, n_embd), jnp.float32) * 0.02
    w_value = jax.random.normal(k3, (n_embd, dim_ffn), jnp.float32) * 0.02
    return time_mix_k, time_mix_r, w_key, w_receptance, w_value


def reference(x, time_mix_k, time_mix_r, w_key, w_receptance, w_value):
    B, T, C = x.shape
    xx = jnp.concatenate([jnp.zeros((B, 1, C), x.dtype), x[:, :-1, :]], axis=1)
    xk = x * time_mix_k + xx * (1.0 - time_mix_k)
    xr = x * time_mix_r + xx * (1.0 - time_mix_r)
    k = jnp.maximum(xk @ w_key.T, 0.0) ** 2
    kv = k @ w_value.T
    return jax.nn.sigmoid(xr @ w_receptance.T) * kv


if __name__ == "__main__":
    B, T = 2, 8
    n_embd, n_layer, dim_ffn, layer_id = 32, 4, 128, 1

    key = jax.random.PRNGKey(0)
    kx, kp = jax.random.split(key)
    x = jax.random.normal(kx, (B, T, n_embd), jnp.float32)
    params = make_params(n_embd, n_layer, dim_ffn, layer_id, kp)

    # One-time parameter prep (transpose + bf16 cast) outside the hot path.
    prepped = prepare_weights(*params)

    out = rwkv_channel_mix(x, *prepped)
    out = jax.block_until_ready(out)

    ref = reference(x, *params)
    assert out.shape == ref.shape
    # bf16 MXU operands / bf16-streamed activations vs f32 reference.
    max_err = float(jnp.max(jnp.abs(out - ref)))
    scale = float(jnp.max(jnp.abs(ref))) + 1e-8
    assert max_err <= 2e-2 * scale + 1e-4, max_err
    print("KERNEL_OK")
</pallas_src>

<mosaic_0001>
module attributes {stable_mosaic.version = 11 : i64} {
  func.func @rwkv_channel_mix_kernel(%arg0: i32, %arg1: i32, %arg2: memref<8x32xbf16, #tpu.memory_space<vmem>>, %arg3: memref<8x32xbf16, #tpu.memory_space<vmem>>, %arg4: memref<1x32xf32, #tpu.memory_space<vmem>>, %arg5: memref<8x32xbf16, #tpu.memory_space<vmem>>, %arg6: memref<32x128xbf16, #tpu.memory_space<vmem>>, %arg7: memref<128x32xbf16, #tpu.memory_space<vmem>>, %arg8: memref<8x32xf32, #tpu.memory_space<vmem>>, %arg9: memref<8x32xbf16, #tpu.memory_space<vmem>>) attributes {dimension_semantics = [#tpu.dimension_semantics<parallel>, #tpu.dimension_semantics<arbitrary>], iteration_bounds = array<i64: 2, 1>, scalar_prefetch = 0 : i64, scratch_operands = 1 : i64, tpu.core_type = #tpu.core_type<tc>, window_params = [{transform_indices = @transform_0, window_bounds = array<i64: 8, 32>}, {transform_indices = @transform_1, window_bounds = array<i64: 8, 32>}, {pipeline_mode = #tpu.pipeline_mode<synchronous>, transform_indices = @transform_2, window_bounds = array<i64: 1, 32>}, {transform_indices = @transform_3, window_bounds = array<i64: 8, 32>}, {transform_indices = @transform_4, window_bounds = array<i64: 32, 128>}, {transform_indices = @transform_5, window_bounds = array<i64: 128, 32>}, {transform_indices = @transform_6, window_bounds = array<i64: 8, 32>}]} {
    %c0_i32 = arith.constant 0 : i32
    %0 = arith.cmpi eq, %arg1, %c0_i32 : i32
    %1 = arith.extui %0 : i1 to i32
    %c0_i32_0 = arith.constant 0 : i32
    %2 = arith.cmpi ne, %1, %c0_i32_0 : i32
    scf.if %2 {
      %c0_14 = arith.constant 0 : index
      %c0_15 = arith.constant 0 : index
      %18 = vector.load %arg2[%c0_14, %c0_15] : memref<8x32xbf16, #tpu.memory_space<vmem>>, vector<8x32xbf16>
      %19 = arith.extf %18 : vector<8x32xbf16> to vector<8x32xf32>
      %c0_16 = arith.constant 0 : index
      %c0_17 = arith.constant 0 : index
      %20 = vector.load %arg3[%c0_16, %c0_17] : memref<8x32xbf16, #tpu.memory_space<vmem>>, vector<8x32xbf16>
      %21 = arith.extf %20 : vector<8x32xbf16> to vector<8x32xf32>
      %c0_18 = arith.constant 0 : index
      %c0_19 = arith.constant 0 : index
      %22 = vector.load %arg4[%c0_18, %c0_19] : memref<1x32xf32, #tpu.memory_space<vmem>>, vector<1x32xf32>
      %23 = arith.subf %19, %21 : vector<8x32xf32>
      %24 = vector.broadcast %22 : vector<1x32xf32> to vector<8x32xf32>
      %25 = arith.mulf %24, %23 : vector<8x32xf32>
      %26 = arith.addf %21, %25 : vector<8x32xf32>
      %27 = arith.truncf %26 : vector<8x32xf32> to vector<8x32xbf16>
      %c0_20 = arith.constant 0 : index
      %c0_21 = arith.constant 0 : index
      %28 = vector.load %arg9[%c0_20, %c0_21] : memref<8x32xbf16, #tpu.memory_space<vmem>>, vector<8x32xbf16>
      tpu.vector_store %arg9[%c0_20, %c0_21], %27 {strides = array<i32>} : memref<8x32xbf16, #tpu.memory_space<vmem>>, vector<8x32xbf16>,
      %cst_22 = arith.constant 0.000000e+00 : f32
      %29 = vector.broadcast %cst_22 : f32 to vector<8x32xf32>
      %c0_23 = arith.constant 0 : index
      %c0_24 = arith.constant 0 : index
      %30 = vector.load %arg8[%c0_23, %c0_24] : memref<8x32xf32, #tpu.memory_space<vmem>>, vector<8x32xf32>
      tpu.vector_store %arg8[%c0_23, %c0_24], %29 {strides = array<i32>} : memref<8x32xf32, #tpu.memory_space<vmem>>, vector<8x32xf32>,
    } else {
    }
    %c0 = arith.constant 0 : index
    %c0_1 = arith.constant 0 : index
    %3 = vector.load %arg9[%c0, %c0_1] : memref<8x32xbf16, #tpu.memory_space<vmem>>, vector<8x32xbf16>
    %c0_2 = arith.constant 0 : index
    %c0_3 = arith.constant 0 : index
    %4 = vector.load %arg6[%c0_2, %c0_3] : memref<32x128xbf16, #tpu.memory_space<vmem>>, vector<32x128xbf16>
    %cst = arith.constant dense<0.000000e+00> : vector<8x128xf32>
    %5 = tpu.matmul %3, %4, %cst {dimension_numbers = #tpu.dot_dimension_numbers<[1], [0], [0], [1], [0, 0, 1, 1], [], []>} : vector<8x32xbf16>, vector<32x128xbf16>, vector<8x128xf32> -> vector<8x128xf32>
    %cst_4 = arith.constant 0.000000e+00 : f32
    %6 = vector.broadcast %cst_4 : f32 to vector<8x128xf32>
    %7 = arith.maximumf %5, %6 : vector<8x128xf32>
    %8 = arith.mulf %7, %7 : vector<8x128xf32>
    %c0_5 = arith.constant 0 : index
    %c0_6 = arith.constant 0 : index
    %9 = vector.load %arg8[%c0_5, %c0_6] : memref<8x32xf32, #tpu.memory_space<vmem>>, vector<8x32xf32>
    %10 = arith.truncf %8 : vector<8x128xf32> to vector<8x128xbf16>
    %c0_7 = arith.constant 0 : index
    %c0_8 = arith.constant 0 : index
    %11 = vector.load %arg7[%c0_7, %c0_8] : memref<128x32xbf16, #tpu.memory_space<vmem>>, vector<128x32xbf16>
    %cst_9 = arith.constant dense<0.000000e+00> : vector<8x32xf32>
    %12 = tpu.matmul %10, %11, %cst_9 {dimension_numbers = #tpu.dot_dimension_numbers<[1], [0], [0], [1], [0, 0, 1, 1], [], []>} : vector<8x128xbf16>, vector<128x32xbf16>, vector<8x32xf32> -> vector<8x32xf32>
    %13 = arith.addf %9, %12 : vector<8x32xf32>
    %c0_10 = arith.constant 0 : index
    %c0_11 = arith.constant 0 : index
    %14 = vector.load %arg8[%c0_10, %c0_11] : memref<8x32xf32, #tpu.memory_space<vmem>>, vector<8x32xf32>
    tpu.vector_store %arg8[%c0_10, %c0_11], %13 {strides = array<i32>} : memref<8x32xf32, #tpu.memory_space<vmem>>, vector<8x32xf32>,
    %c0_i32_12 = arith.constant 0 : i32
    %15 = arith.cmpi eq, %arg1, %c0_i32_12 : i32
    %16 = arith.extui %15 : i1 to i32
    %c0_i32_13 = arith.constant 0 : i32
    %17 = arith.cmpi ne, %16, %c0_i32_13 : i32
    scf.if %17 {
      %c0_14 = arith.constant 0 : index
      %c0_15 = arith.constant 0 : index
      %18 = vector.load %arg5[%c0_14, %c0_15] : memref<8x32xbf16, #tpu.memory_space<vmem>>, vector<8x32xbf16>
      %19 = arith.extf %18 : vector<8x32xbf16> to vector<8x32xf32>
      %c0_16 = arith.constant 0 : index
      %c0_17 = arith.constant 0 : index
      %20 = vector.load %arg8[%c0_16, %c0_17] : memref<8x32xf32, #tpu.memory_space<vmem>>, vector<8x32xf32>
      %21 = arith.mulf %19, %20 : vector<8x32xf32>
      %c0_18 = arith.constant 0 : index
      %c0_19 = arith.constant 0 : index
      %22 = vector.load %arg8[%c0_18, %c0_19] : memref<8x32xf32, #tpu.memory_space<vmem>>, vector<8x32xf32>
      tpu.vector_store %arg8[%c0_18, %c0_19], %21 {strides = array<i32>} : memref<8x32xf32, #tpu.memory_space<vmem>>, vector<8x32xf32>,
    } else {
    }
    return
  }
  func.func @transform_0(%arg0: i32, %arg1: i32) -> (i32, i32) {
    %c0_i32 = arith.constant 0 : i32
    %c0_i32_0 = arith.constant 0 : i32
    return %arg0, %c0_i32 : i32, i32
  }
  func.func @transform_1(%arg0: i32, %arg1: i32) -> (i32, i32) {
    %c0_i32 = arith.constant 0 : i32
    %c0_i32_0 = arith.constant 0 : i32
    return %arg0, %c0_i32 : i32, i32
  }
  func.func @transform_2(%arg0: i32, %arg1: i32) -> (i32, i32) {
    %c0_i32 = arith.constant 0 : i32
    %c0_i32_0 = arith.constant 0 : i32
    %c0_i32_1 = arith.constant 0 : i32
    return %c0_i32, %c0_i32_0 : i32, i32
  }
  func.func @transform_3(%arg0: i32, %arg1: i32) -> (i32, i32) {
    %c0_i32 = arith.constant 0 : i32
    %c0_i32_0 = arith.constant 0 : i32
    return %arg0, %c0_i32 : i32, i32
  }
  func.func @transform_4(%arg0: i32, %arg1: i32) -> (i32, i32) {
    %c0_i32 = arith.constant 0 : i32
    %c0_i32_0 = arith.constant 0 : i32
    return %c0_i32, %arg1 : i32, i32
  }
  func.func @transform_5(%arg0: i32, %arg1: i32) -> (i32, i32) {
    %c0_i32 = arith.constant 0 : i32
    %c0_i32_0 = arith.constant 0 : i32
    return %arg1, %c0_i32 : i32, i32
  }
  func.func @transform_6(%arg0: i32, %arg1: i32) -> (i32, i32) {
    %c0_i32 = arith.constant 0 : i32
    %c0_i32_0 = arith.constant 0 : i32
    return %arg0, %c0_i32 : i32, i32
  }
}

</mosaic_0001>

<llo_original>
// kernel: rwkv_channel_mix.1
$region0: #{rwkv_channel_mix.1}
  #allocation0 [shape = 'u32[]', space=smem, size = 0x4, offset = 0x4, fixed_abs, tag = 'smem constant byte address 0x4 - core index']
  #allocation1 [shape = 'u32[144,128]{1,0:T(1,128)}', space=vmem, size = 0x12000, scoped, tag = 'internal scratch']
  #allocation2 [shape = 'bf16[8,32]{1,0:T(8,128)(2,1)}', space=vmem, size = 0x800, scoped, tag = 'scratch operand']
  %s0 = inlined_call_operand.hbm [shape: bf16[16,32], index: 0, kind: input, shape index: {}]
  %s1 = inlined_call_operand.hbm [shape: bf16[16,32], index: 1, kind: input, shape index: {}]
  %s2 = inlined_call_operand.hbm [shape: f32[1,32], index: 2, kind: input, shape index: {}]
  %s3 = inlined_call_operand.hbm [shape: bf16[16,32], index: 3, kind: input, shape index: {}]
  %s4 = inlined_call_operand.hbm [shape: bf16[32,128], index: 4, kind: input, shape index: {}]
  %s5 = inlined_call_operand.hbm [shape: bf16[128,32], index: 5, kind: input, shape index: {}]
  %s6 = inlined_call_operand.hbm [shape: f32[16,32], index: 6, kind: output, shape index: {}]
  %s7 = sld [smem:[#allocation0]]
  $region89: #{rwkv_channel_mix.1} parent=0
    _
  %s9 = ssub.s32 1, %s7
  %s10 = scalar_select 0, %s9, %s7
  $region1: #{rwkv_channel_mix.1} parent=0
    #allocation3 [shape = 'u8[4096]{0}', space=vmem, size = 0x1000, scoped, tag = 'input window, operand 0']
    #allocation4 [shape = 's32[2]{0}', space=sflag, size = 0x8, scoped, tag = 'scoped memory for rwkv_channel_mix.1']
    #allocation5 [shape = 's32[2]{0}', space=sflag, size = 0x8, scoped, tag = 'scoped memory for rwkv_channel_mix.1']
    #allocation6 [shape = 'u8[4096]{0}', space=vmem, size = 0x1000, scoped, tag = 'input window, operand 1']
    #allocation7 [shape = 's32[2]{0}', space=sflag, size = 0x8, scoped, tag = 'scoped memory for rwkv_channel_mix.1']
    #allocation8 [shape = 'u8[512]{0}', space=vmem, size = 0x400, scoped, tag = 'input window, operand 2, single buffered']
    #allocation9 [shape = 'u8[4096]{0}', space=vmem, size = 0x1000, scoped, tag = 'input window, operand 3']
    #allocation10 [shape = 's32[2]{0}', space=sflag, size = 0x8, scoped, tag = 'scoped memory for rwkv_channel_mix.1']
    #allocation11 [shape = 'u8[8192]{0}', space=vmem, size = 0x2000, scoped, tag = 'input window, operand 4, single buffered']
    #allocation12 [shape = 'u8[32768]{0}', space=vmem, size = 0x8000, scoped, tag = 'input window, operand 5, single buffered']
    #allocation13 [shape = 's32[1]{0}', space=sflag, size = 0x4, scoped, tag = 'scoped memory for rwkv_channel_mix.1']
    #allocation14 [shape = 'u8[8192]{0}', space=vmem, size = 0x2000, scoped, tag = 'output window, operand 0']
    %11 = vsyncpa [#allocation4], 0
    %s12 = scalar_lea.sflag [#allocation4], 1
    %13 = vsyncpa %s12, 0
    %14 = vsyncpa [#allocation7], 0
    %s15 = scalar_lea.sflag [#allocation7], 1
    %16 = vsyncpa %s15, 0
    %17 = vsyncpa [#allocation10], 0
    %s18 = scalar_lea.sflag [#allocation10], 1
    %19 = vsyncpa %s18, 0
    %20 = vsyncpa [#allocation13], 0
    %21 = vsyncpa [#allocation5], 0
    %s22 = scalar_lea.sflag [#allocation5], 1
    %23 = vsyncpa %s22, 0
    loop: start=0, step=1, limit=4
    $region2: #{rwkv_channel_mix.1} parent=1 // loop_pre_header
      _
    $region3: #{rwkv_channel_mix.1} parent=1 // loop_header
      %s25 = sphi 0, %s29
      %p26 = scmp.ge.s32.totalorder %s25, 4
      %s32 = sphi 0, %s44
      %s33 = sphi 0, %s40
      %s34 = sphi 0, %s32
      %s35 = sphi 0, %s33
      %s36 = sphi 0, %s34
      %s37 = sphi 0, %s35
      %s47 = sphi 0, %s49
      %s50 = sphi 0, %s47
      %s51 = sphi 0, %s50
      %s67 = sphi 0, %s51
      %s73 = sphi 0, %s75
      %s76 = sphi 0, %s73
      %s77 = sphi 0, %s76
      %s93 = sphi 0, %s77
      %s97 = sphi 0, %s97
      %s99 = sphi 0, %s97
      %s100 = sphi 0, %s99
      %s114 = sphi 0, %s100
      %s120 = sphi 0, %s122
      %s123 = sphi 0, %s120
      %s124 = sphi 0, %s123
      %s140 = sphi 0, %s124
      %s146 = sphi 0, %s148
      %s149 = sphi 0, %s146
      %s150 = sphi 0, %s149
      %s166 = sphi 0, %s150
      %s172 = sphi 0, %s174
      %s175 = sphi 0, %s172
      %s176 = sphi 0, %s175
      %s192 = sphi 0, %s176
      %s198 = sphi 0, %s200
      %s201 = sphi 0, %s198
      %s202 = sphi 0, %s201
      %s218 = sphi 0, %s202
    $region4: #{rwkv_channel_mix.1} parent=1 // loop_header_branch
      %28 = sbr.rel (%p26) target = $region8
    $region5: #{rwkv_channel_mix.1} parent=1 // loop_body
      %s30 = ssub.s32 %s25, 1
      %s31 = ssub.s32 %s25, 2
      %s38 = sadd.s32 1, %s33
      %p39 = scmp.ge.s32.totalorder %s38, 1
      %s40 = scalar_select %p39, 0, %s38
      %s41 = sadd.s32 1, %s32
      %s42 = scalar_select %p39, %s41, %s32
      %p43 = scmp.ge.s32.totalorder %s42, 2
      %s44 = scalar_select %p43, 0, %s42
      %s45 = ssub.s32 %s32, %s44
      %p46 = scmp.eq.s32.totalorder %s45, 0
      %s48 = sadd.s32 %s47, 1
      %s49 = scalar_select %p46, %s47, %s48
      %p52 = pneg %p46
      %p53 = scmp.eq.s32.totalorder %s25, 1
      %p54 = por %p52, %p53
      %p55 = scmp.ne.s32.totalorder %s47, %s50
      %p56 = scmp.eq.s32.totalorder %s25, 0
      %p57 = por %p55, %p56
      %p58 = scmp.ne.s32.totalorder %s47, %s50
      %p59 = scmp.eq.s32.totalorder %s30, 1
      %p60 = por %p58, %p59
      %p61 = scmp.ne.s32.totalorder %s50, %s51
      %p62 = scmp.eq.s32.totalorder %s30, 0
      %p63 = por %p61, %p62
      %p64 = scmp.ne.s32.totalorder %s50, %s51
      %p65 = scmp.eq.s32.totalorder %s31, 1
      %p66 = por %p64, %p65
      %p68 = scmp.ne.s32.totalorder %s51, %s67
      %p69 = scmp.eq.s32.totalorder %s31, 0
      %p70 = por %p68, %p69
      %s71 = ssub.s32 %s32, %s44
      %p72 = scmp.eq.s32.totalorder %s71, 0
      %s74 = sadd.s32 %s73, 1
      %s75 = scalar_select %p72, %s73, %s74
      %p78 = pneg %p72
      %p79 = scmp.eq.s32.totalorder %s25, 1
      %p80 = por %p78, %p79
      %p81 = scmp.ne.s32.totalorder %s73, %s76
      %p82 = scmp.eq.s32.totalorder %s25, 0
      %p83 = por %p81, %p82
      %p84 = scmp.ne.s32.totalorder %s73, %s76
      %p85 = scmp.eq.s32.totalorder %s30, 1
      %p86 = por %p84, %p85
      %p87 = scmp.ne.s32.totalorder %s76, %s77
      %p88 = scmp.eq.s32.totalorder %s30, 0
      %p89 = por %p87, %p88
      %p90 = scmp.ne.s32.totalorder %s76, %s77
      %p91 = scmp.eq.s32.totalorder %s31, 1
      %p92 = por %p90, %p91
      %p94 = scmp.ne.s32.totalorder %s77, %s93
      %p95 = scmp.eq.s32.totalorder %s31, 0
      %p96 = por %p94, %p95
      %s98 = sadd.s32 %s97, 1
      %p101 = scmp.eq.s32.totalorder %s25, 1
      %p102 = scmp.ne.s32.totalorder %s97, %s99
      %p103 = scmp.eq.s32.totalorder %s25, 0
      %p104 = por %p102, %p103
      %p105 = scmp.ne.s32.totalorder %s97, %s99
      %p106 = scmp.eq.s32.totalorder %s30, 1
      %p107 = por %p105, %p106
      %p108 = scmp.ne.s32.totalorder %s99, %s100
      %p109 = scmp.eq.s32.totalorder %s30, 0
      %p110 = por %p108, %p109
      %p111 = scmp.ne.s32.totalorder %s99, %s100
      %p112 = scmp.eq.s32.totalorder %s31, 1
      %p113 = por %p111, %p112
      %p115 = scmp.ne.s32.totalorder %s100, %s114
      %p116 = scmp.eq.s32.totalorder %s31, 0
      %p117 = por %p115, %p116
      %s118 = ssub.s32 %s32, %s44
      %p119 = scmp.eq.s32.totalorder %s118, 0
      %s121 = sadd.s32 %s120, 1
      %s122 = scalar_select %p119, %s120, %s121
      %p125 = pneg %p119
      %p126 = scmp.eq.s32.totalorder %s25, 1
      %p127 = por %p125, %p126
      %p128 = scmp.ne.s32.totalorder %s120, %s123
      %p129 = scmp.eq.s32.totalorder %s25, 0
      %p130 = por %p128, %p129
      %p131 = scmp.ne.s32.totalorder %s120, %s123
      %p132 = scmp.eq.s32.totalorder %s30, 1
      %p133 = por %p131, %p132
      %p134 = scmp.ne.s32.totalorder %s123, %s124
      %p135 = scmp.eq.s32.totalorder %s30, 0
      %p136 = por %p134, %p135
      %p137 = scmp.ne.s32.totalorder %s123, %s124
      %p138 = scmp.eq.s32.totalorder %s31, 1
      %p139 = por %p137, %p138
      %p141 = scmp.ne.s32.totalorder %s124, %s140
      %p142 = scmp.eq.s32.totalorder %s31, 0
      %p143 = por %p141, %p142
      %s144 = ssub.s32 %s33, %s40
      %p145 = scmp.eq.s32.totalorder %s144, 0
      %s147 = sadd.s32 %s146, 1
      %s148 = scalar_select %p145, %s146, %s147
      %p151 = pneg %p145
      %p152 = scmp.eq.s32.totalorder %s25, 1
      %p153 = por %p151, %p152
      %p154 = scmp.ne.s32.totalorder %s146, %s149
      %p155 = scmp.eq.s32.totalorder %s25, 0
      %p156 = por %p154, %p155
      %p157 = scmp.ne.s32.totalorder %s146, %s149
      %p158 = scmp.eq.s32.totalorder %s30, 1
      %p159 = por %p157, %p158
      %p160 = scmp.ne.s32.totalorder %s149, %s150
      %p161 = scmp.eq.s32.totalorder %s30, 0
      %p162 = por %p160, %p161
      %p163 = scmp.ne.s32.totalorder %s149, %s150
      %p164 = scmp.eq.s32.totalorder %s31, 1
      %p165 = por %p163, %p164
      %p167 = scmp.ne.s32.totalorder %s150, %s166
      %p168 = scmp.eq.s32.totalorder %s31, 0
      %p169 = por %p167, %p168
      %s170 = ssub.s32 %s33, %s40
      %p171 = scmp.eq.s32.totalorder %s170, 0
      %s173 = sadd.s32 %s172, 1
      %s174 = scalar_select %p171, %s172, %s173
      %p177 = pneg %p171
      %p178 = scmp.eq.s32.totalorder %s25, 1
      %p179 = por %p177, %p178
      %p180 = scmp.ne.s32.totalorder %s172, %s175
      %p181 = scmp.eq.s32.totalorder %s25, 0
      %p182 = por %p180, %p181
      %p183 = scmp.ne.s32.totalorder %s172, %s175
      %p184 = scmp.eq.s32.totalorder %s30, 1
      %p185 = por %p183, %p184
      %p186 = scmp.ne.s32.totalorder %s175, %s176
      %p187 = scmp.eq.s32.totalorder %s30, 0
      %p188 = por %p186, %p187
      %p189 = scmp.ne.s32.totalorder %s175, %s176
      %p190 = scmp.eq.s32.totalorder %s31, 1
      %p191 = por %p189, %p190
      %p193 = scmp.ne.s32.totalorder %s176, %s192
      %p194 = scmp.eq.s32.totalorder %s31, 0
      %p195 = por %p193, %p194
      %s196 = ssub.s32 %s32, %s44
      %p197 = scmp.eq.s32.totalorder %s196, 0
      %s199 = sadd.s32 %s198, 1
      %s200 = scalar_select %p197, %s198, %s199
      %p203 = pneg %p197
      %p204 = scmp.eq.s32.totalorder %s25, 1
      %p205 = por %p203, %p204
      %p206 = scmp.ne.s32.totalorder %s198, %s201
      %p207 = scmp.eq.s32.totalorder %s25, 0
      %p208 = por %p206, %p207
      %p209 = scmp.ne.s32.totalorder %s198, %s201
      %p210 = scmp.eq.s32.totalorder %s30, 1
      %p211 = por %p209, %p210
      %p212 = scmp.ne.s32.totalorder %s201, %s202
      %p213 = scmp.eq.s32.totalorder %s30, 0
      %p214 = por %p212, %p213
      %p215 = scmp.ne.s32.totalorder %s201, %s202
      %p216 = scmp.eq.s32.totalorder %s31, 1
      %p217 = por %p215, %p216
      %p219 = scmp.ne.s32.totalorder %s202, %s218
      %p220 = scmp.eq.s32.totalorder %s31, 0
      %p221 = por %p219, %p220
      %p222 = scmp.le.s32.totalorder 1, %s25
      %p223 = scmp.lt.s32.totalorder %s25, 3
      %p224 = pnand %p222, %p223
      %p225 = pneg %p224
      // Predicated region
      $region9: #{rwkv_channel_mix.1} parent=5 // pred_check
        _
      $region10: #{rwkv_channel_mix.1} parent=5 // pred_check_branch
        %227 = sbr.rel (%p224) target = $region12
      $region11: #{rwkv_channel_mix.1} parent=5 // pred_region
        %s228 = ssub.s32 %s25, 1
        // Predicated region
        $region13: #{rwkv_channel_mix.1} parent=11 // pred_check
          %p229 = pneg %p110
        $region14: #{rwkv_channel_mix.1} parent=11 // pred_check_branch
          %231 = sbr.rel (%p229) target = $region16
        $region15: #{rwkv_channel_mix.1} parent=11 // pred_region
          %s233 = ssub.s32 16, 16
          %234 = vsyncadd [#allocation7], %s233
          %s236 = sshll.u32 [#allocation8], 4
          %s237 = int_to_ptr.vmem [resolvable:$true] %s236
          %239 = dma.hbm_to_vmem [thread:$0]  %s2, 16, %s237, [#allocation7]
        $region16: #{rwkv_channel_mix.1} parent=11 // pred_fallthru
          _
        // Predicated region
        $region17: #{rwkv_channel_mix.1} parent=11 // pred_check
          %p240 = pneg %p162
        $region18: #{rwkv_channel_mix.1} parent=11 // pred_check_branch
          %242 = sbr.rel (%p240) target = $region20
        $region19: #{rwkv_channel_mix.1} parent=11 // pred_region
          %s244 = ssub.s32 256, 256
          %245 = vsyncadd [#allocation10], %s244
          %s246 = smul.addr %s35, 64
          %s247 = scalar_lea.hbm %s4, %s246
          %s248 = sshll.u32 [#allocation11], 4
          %s249 = int_to_ptr.vmem [resolvable:$true] %s248
          %254 = dma.hbm_to_vmem [thread:$0]  %s247, 256, %s249, [#allocation10], 64, 64, 4
        $region20: #{rwkv_channel_mix.1} parent=11 // pred_fallthru
          _
        // Predicated region
        $region21: #{rwkv_channel_mix.1} parent=11 // pred_check
          %p255 = pneg %p188
        $region22: #{rwkv_channel_mix.1} parent=11 // pred_check_branch
          %257 = sbr.rel (%p255) target = $region24
        $region23: #{rwkv_channel_mix.1} parent=11 // pred_region
          %s258 = smul.u32 16, %s35
          %s260 = ssub.s32 1024, 1024
          %261 = vsyncadd [#allocation13], %s260
          %s262 = smul.addr %s258, 64
          %s263 = scalar_lea.hbm %s5, %s262
          %s264 = sshll.u32 [#allocation12], 4
          %s265 = int_to_ptr.vmem [resolvable:$true] %s264
          %270 = dma.hbm_to_vmem [thread:$0]  %s263, 1024, %s265, [#allocation13], 64, 64, 4
        $region24: #{rwkv_channel_mix.1} parent=11 // pred_fallthru
          _
      $region12: #{rwkv_channel_mix.1} parent=5 // pred_fallthru
        _
      %p271 = scmp.lt.s32.totalorder %s25, 2
      // Predicated region
      $region25: #{rwkv_channel_mix.1} parent=5 // pred_check
        %p272 = pneg %p271
      $region26: #{rwkv_channel_mix.1} parent=5 // pred_check_branch
        %274 = sbr.rel (%p272) target = $region28
      $region27: #{rwkv_channel_mix.1} parent=5 // pred_region
        // Predicated region
        $region29: #{rwkv_channel_mix.1} parent=27 // pred_check
          %p275 = pneg %p57
        $region30: #{rwkv_channel_mix.1} parent=27 // pred_check_branch
          %277 = sbr.rel (%p275) target = $region32
        $region31: #{rwkv_channel_mix.1} parent=27 // pred_region
          %s278 = sand.u32 %s47, 1
          %s279 = scalar_lea.sflag [#allocation4], %s278
          %s280 = sand.u32 %s47, 1
          %s281 = smul.addr %s280, 4
          %s282 = scalar_lea.vmem [#allocation3], %s281
          %s284 = ssub.s32 64, 64
          %285 = vsyncadd %s279, %s284
          %s286 = smul.addr %s32, 64
          %s287 = scalar_lea.hbm %s0, %s286
          %s289 = sshll.u32 %s282, 4
          %s290 = int_to_ptr.vmem [resolvable:$true] %s289
          %292 = dma.hbm_to_vmem [thread:$0]  %s287, 64, %s290, %s279
        $region32: #{rwkv_channel_mix.1} parent=27 // pred_fallthru
          _
        // Predicated region
        $region33: #{rwkv_channel_mix.1} parent=27 // pred_check
          %p293 = pneg %p83
        $region34: #{rwkv_channel_mix.1} parent=27 // pred_check_branch
          %295 = sbr.rel (%p293) target = $region36
        $region35: #{rwkv_channel_mix.1} parent=27 // pred_region
          %s296 = sand.u32 %s25, 1
          %s297 = scalar_lea.sflag [#allocation7], %s296
          %s298 = sand.u32 %s73, 1
          %s299 = smul.addr %s298, 4
          %s300 = scalar_lea.vmem [#allocation6], %s299
          %s302 = ssub.s32 64, 64
          %303 = vsyncadd %s297, %s302
          %s304 = smul.addr %s32, 64
          %s305 = scalar_lea.hbm %s1, %s304
          %s307 = sshll.u32 %s300, 4
          %s308 = int_to_ptr.vmem [resolvable:$true] %s307
          %310 = dma.hbm_to_vmem [thread:$0]  %s305, 64, %s308, %s297
        $region36: #{rwkv_channel_mix.1} parent=27 // pred_fallthru
          _
        // Predicated region
        $region37: #{rwkv_channel_mix.1} parent=27 // pred_check
          %p311 = pneg %p130
        $region38: #{rwkv_channel_mix.1} parent=27 // pred_check_branch
          %313 = sbr.rel (%p311) target = $region40
        $region39: #{rwkv_channel_mix.1} parent=27 // pred_region
          %s314 = sand.u32 %s25, 1
          %s315 = scalar_lea.sflag [#allocation10], %s314
          %s316 = sand.u32 %s120, 1
          %s317 = smul.addr %s316, 4
          %s318 = scalar_lea.vmem [#allocation9], %s317
          %s320 = ssub.s32 64, 64
          %321 = vsyncadd %s315, %s320
          %s322 = smul.addr %s32, 64
          %s323 = scalar_lea.hbm %s3, %s322
          %s325 = sshll.u32 %s318, 4
          %s326 = int_to_ptr.vmem [resolvable:$true] %s325
          %328 = dma.hbm_to_vmem [thread:$0]  %s323, 64, %s326, %s315
        $region40: #{rwkv_channel_mix.1} parent=27 // pred_fallthru
          _
      $region28: #{rwkv_channel_mix.1} parent=5 // pred_fallthru
        _
      %p329 = scmp.le.s32.totalorder 1, %s25
      %p330 = scmp.lt.s32.totalorder %s25, 3
      %p331 = pnand %p329, %p330
      %p332 = pneg %p331
      // Predicated region
      $region41: #{rwkv_channel_mix.1} parent=5 // pred_check
        _
      $region42: #{rwkv_channel_mix.1} parent=5 // pred_check_branch
        %334 = sbr.rel (%p331) target = $region44
      $region43: #{rwkv_channel_mix.1} parent=5 // pred_region
        %s335 = ssub.s32 %s25, 1
        %s336 = sand.u32 %s50, 1
        %s337 = scalar_lea.sflag [#allocation4], %s336
        %s338 = sand.u32 %s50, 1
        %s339 = smul.addr %s338, 4
        %s340 = scalar_lea.vmem [#allocation3], %s339
        // Predicated region
        $region45: #{rwkv_channel_mix.1} parent=43 // pred_check
          %p341 = pneg %p63
        $region46: #{rwkv_channel_mix.1} parent=43 // pred_check_branch
          %343 = sbr.rel (%p341) target = $region48
        $region47: #{rwkv_channel_mix.1} parent=43 // pred_region
          %344 = dma.done %s337, 64
        $region48: #{rwkv_channel_mix.1} parent=43 // pred_fallthru
          _
        %s345 = sand.u32 %s30, 1
        %s346 = scalar_lea.sflag [#allocation7], %s345
        %s347 = sand.u32 %s76, 1
        %s348 = smul.addr %s347, 4
        %s349 = scalar_lea.vmem [#allocation6], %s348
        // Predicated region
        $region49: #{rwkv_channel_mix.1} parent=43 // pred_check
          %p350 = pneg %p89
        $region50: #{rwkv_channel_mix.1} parent=43 // pred_check_branch
          %352 = sbr.rel (%p350) target = $region52
        $region51: #{rwkv_channel_mix.1} parent=43 // pred_region
          %353 = dma.done %s346, 64
        $region52: #{rwkv_channel_mix.1} parent=43 // pred_fallthru
          _
        // Predicated region
        $region53: #{rwkv_channel_mix.1} parent=43 // pred_check
          %p354 = pneg %p110
        $region54: #{rwkv_channel_mix.1} parent=43 // pred_check_branch
          %356 = sbr.rel (%p354) target = $region56
        $region55: #{rwkv_channel_mix.1} parent=43 // pred_region
          %357 = dma.done [#allocation7], 16
        $region56: #{rwkv_channel_mix.1} parent=43 // pred_fallthru
          _
        %s358 = sand.u32 %s30, 1
        %s359 = scalar_lea.sflag [#allocation10], %s358
        %s360 = sand.u32 %s123, 1
        %s361 = smul.addr %s360, 4
        %s362 = scalar_lea.vmem [#allocation9], %s361
        // Predicated region
        $region57: #{rwkv_channel_mix.1} parent=43 // pred_check
          %p363 = pneg %p136
        $region58: #{rwkv_channel_mix.1} parent=43 // pred_check_branch
          %365 = sbr.rel (%p363) target = $region60
        $region59: #{rwkv_channel_mix.1} parent=43 // pred_region
          %366 = dma.done %s359, 64
        $region60: #{rwkv_channel_mix.1} parent=43 // pred_fallthru
          _
        // Predicated region
        $region61: #{rwkv_channel_mix.1} parent=43 // pred_check
          %p367 = pneg %p162
        $region62: #{rwkv_channel_mix.1} parent=43 // pred_check_branch
          %369 = sbr.rel (%p367) target = $region64
        $region63: #{rwkv_channel_mix.1} parent=43 // pred_region
          %370 = dma.done [#allocation10], 256
        $region64: #{rwkv_channel_mix.1} parent=43 // pred_fallthru
          _
        // Predicated region
        $region65: #{rwkv_channel_mix.1} parent=43 // pred_check
          %p371 = pneg %p188
        $region66: #{rwkv_channel_mix.1} parent=43 // pred_check_branch
          %373 = sbr.rel (%p371) target = $region68
        $region67: #{rwkv_channel_mix.1} parent=43 // pred_region
          %374 = dma.done [#allocation13], 1024
        $region68: #{rwkv_channel_mix.1} parent=43 // pred_fallthru
          _
        %s375 = sand.u32 %s50, 1
        %s376 = scalar_lea.sflag [#allocation4], %s375
        %s377 = sand.u32 %s50, 1
        %s378 = smul.addr %s377, 4
        %s379 = scalar_lea.vmem [#allocation3], %s378
        %p380 = pneg %p63
        %p381 = pneg %p60
        %s382 = sand.u32 %s30, 1
        %s383 = scalar_lea.sflag [#allocation7], %s382
        %s384 = sand.u32 %s76, 1
        %s385 = smul.addr %s384, 4
        %s386 = scalar_lea.vmem [#allocation6], %s385
        %p387 = pneg %p89
        %p388 = pneg %p86
        %p389 = pneg %p110
        %p390 = pneg %p107
        %s391 = sand.u32 %s30, 1
        %s392 = scalar_lea.sflag [#allocation10], %s391
        %s393 = sand.u32 %s123, 1
        %s394 = smul.addr %s393, 4
        %s395 = scalar_lea.vmem [#allocation9], %s394
        %p396 = pneg %p136
        %p397 = pneg %p133
        %p398 = pneg %p162
        %p399 = pneg %p159
        %p400 = pneg %p188
        %p401 = pneg %p185
        %p402 = pneg %p214
        %p403 = pneg %p211
        %s404 = sand.u32 %s201, 1
        %s405 = scalar_lea.sflag [#allocation5], %s404
        %s406 = sand.u32 %s201, 1
        %s407 = smul.addr %s406, 8
        %s408 = scalar_lea.vmem [#allocation14], %s407
        %s409 = smul.u32 16, %s35
        %p411 = scmp.eq.s32.totalorder %s35, 0
        // Predicated region
        $region69: #{rwkv_channel_mix.1} parent=43 // pred_check
          %p412 = pneg %p411
        $region70: #{rwkv_channel_mix.1} parent=43 // pred_check_branch
          %414 = sbr.rel (%p412) target = $region72
        $region71: #{rwkv_channel_mix.1} parent=43 // pred_region
          %v415 = vld [vmem:[%s340] sm:$0xf]
          %v416 = vunpack.c.l.bf16 %v415
          %v417 = vld [vmem:[%s349] sm:$0xf]
          %v418 = vunpack.c.l.bf16 %v417
          %v419 = vld [vmem:[#allocation8] sm:$0x1]
          %v420 = vsub.f32 %v416, %v418
          %v422 = vlaneseq
          %v423 = vshrl.u32 %v422, 7
          %v424 = vsub.s32 0, %v423
          %v425 = vrot.slane %v419, %v424
          %v427 = vmul.f32 %v425, %v420
          %v428 = vadd.f32 %v418, %v427
          %v429 = vpack.c.bf16 %v428, %v428
          %vm430 = vcmask 257024
          %431 = vst.msk [vmem:[#allocation2] sm:$0xf] %vm430, %v429
          %vm432 = vcmask 261120
          %433 = vst.msk [vmem:[%s408] sm:$0xff] %vm432, 0.0
        $region72: #{rwkv_channel_mix.1} parent=43 // pred_fallthru
          _
        %v434 = vld [vmem:[#allocation2] sm:$0xf]
        %v435 = vld [vmem:[#allocation11] sm:$0xf]
        %v436 = vld [vmem:[#allocation11 + $0x4] sm:$0xf]
        %v437 = vld [vmem:[#allocation11 + $0x8] sm:$0xf]
        %v438 = vld [vmem:[#allocation11 + $0xc] sm:$0xf]
        %v443 = vunpack.c.l.b16 %v435
        %v444 = vunpack.c.l.b16 %v436
        %v445 = vunpack.c.l.b16 %v437
        %v446 = vunpack.c.l.b16 %v438
        %v447 = vpack.c.b16 %v444, %v443
        %v448 = vpack.c.b16 %v446, %v445
        %vm451 = vcmask 261120
        %v453 = vsel %vm451, %v434, 0
        %455 = vmatprep.subr.bf16.mxu0 0
        %456 = vmatpush1.bf16.msra.mxu0 %v447
        %457 = vmatprep.subr.bf16.mxu0 0
        %458 = vmatpush1.bf16.msra.mxu0 %v448
        %459 = vmatprep.subr.bf16.mxu0 0
        %460 = vmatpush1.bf16.msra.mxu0 0
        %461 = vmatprep.subr.bf16.mxu0 0
        %462 = vmatpush1.bf16.msra.mxu0 0
        %463 = vmatprep.subr.bf16.mxu0 0
        %464 = vmatpush1.bf16.msra.mxu0 0
        %465 = vmatprep.subr.bf16.mxu0 0
        %466 = vmatpush1.bf16.msra.mxu0 0
        %467 = vmatprep.subr.bf16.mxu0 0
        %468 = vmatpush1.bf16.msra.mxu0 0
        %469 = vmatprep.subr.bf16.mxu0 0
        %470 = vmatpush1.bf16.msra.mxu0 0
        %471 = vmatprep.subr.bf16.mxu0 0
        %472 = vmatpush1.bf16.msra.mxu0 0
        %473 = vmatprep.subr.bf16.mxu0 0
        %474 = vmatpush1.bf16.msra.mxu0 0
        %475 = vmatprep.subr.bf16.mxu0 0
        %476 = vmatpush1.bf16.msra.mxu0 0
        %477 = vmatprep.subr.bf16.mxu0 0
        %478 = vmatpush1.bf16.msra.mxu0 0
        %479 = vmatprep.subr.bf16.mxu0 0
        %480 = vmatpush1.bf16.msra.mxu0 0
        %481 = vmatprep.subr.bf16.mxu0 0
        %482 = vmatpush1.bf16.msra.mxu0 0
        %483 = vmatprep.subr.bf16.mxu0 0
        %484 = vmatpush1.bf16.msra.mxu0 0
        %485 = vmatprep.subr.bf16.mxu0 0
        %486 = vmatpush1.bf16.msra.mxu0 0
        %487 = vmatprep.mubr.bf16.mxu0 0
        %488 = vmatmul.mubr.bf16.gmra.mrb[0].mxu0 %v453
        %v489 = vpop.f32.mrb[0].mxu0
        %v490 = vadd.f32 0.0, %v489
        %v491 = vpop.f32.mrb[0].mxu0
        %v492 = vpop.f32.mrb[0].mxu0
        %v493 = vpop.f32.mrb[0].mxu0
        %494 = vdwg.mxu0
        %v495 = vmax.f32 %v490, 0.0
        %v496 = vmul.f32 %v495, %v495
        %v497 = vld [vmem:[%s408] sm:$0xff]
        %v498 = vpack.c.bf16 %v496, %v496
        %v499 = vld [vmem:[#allocation12] sm:$0xf]
        %v500 = vld [vmem:[#allocation12 + $0x4] sm:$0xf]
        %v501 = vld [vmem:[#allocation12 + $0x8] sm:$0xf]
        %v502 = vld [vmem:[#allocation12 + $0xc] sm:$0xf]
        %v503 = vld [vmem:[#allocation12 + $0x10] sm:$0xf]
        %v504 = vld [vmem:[#allocation12 + $0x14] sm:$0xf]
        %v505 = vld [vmem:[#allocation12 + $0x18] sm:$0xf]
        %v506 = vld [vmem:[#allocation12 + $0x1c] sm:$0xf]
        %v507 = vld [vmem:[#allocation12 + $0x20] sm:$0xf]
        %v508 = vld [vmem:[#allocation12 + $0x24] sm:$0xf]
        %v509 = vld [vmem:[#allocation12 + $0x28] sm:$0xf]
        %v510 = vld [vmem:[#allocation12 + $0x2c] sm:$0xf]
        %v511 = vld [vmem:[#allocation12 + $0x30] sm:$0xf]
        %v512 = vld [vmem:[#allocation12 + $0x34] sm:$0xf]
        %v513 = vld [vmem:[#allocation12 + $0x38] sm:$0xf]
        %v514 = vld [vmem:[#allocation12 + $0x3c] sm:$0xf]
        %v531 = vunpack.c.l.b16 %v499
        %v532 = vunpack.c.l.b16 %v500
        %v533 = vunpack.c.l.b16 %v501
        %v534 = vunpack.c.l.b16 %v502
        %v535 = vunpack.c.l.b16 %v503
        %v536 = vunpack.c.l.b16 %v504
        %v537 = vunpack.c.l.b16 %v505
        %v538 = vunpack.c.l.b16 %v506
        %v539 = vunpack.c.l.b16 %v507
        %v540 = vunpack.c.l.b16 %v508
        %v541 = vunpack.c.l.b16 %v509
        %v542 = vunpack.c.l.b16 %v510
        %v543 = vunpack.c.l.b16 %v511
        %v544 = vunpack.c.l.b16 %v512
        %v545 = vunpack.c.l.b16 %v513
        %v546 = vunpack.c.l.b16 %v514
        %v547 = vpack.c.b16 %v532, %v531
        %v548 = vpack.c.b16 %v534, %v533
        %v549 = vpack.c.b16 %v536, %v535
        %v550 = vpack.c.b16 %v538, %v537
        %v551 = vpack.c.b16 %v540, %v539
        %v552 = vpack.c.b16 %v542, %v541
        %v553 = vpack.c.b16 %v544, %v543
        %v554 = vpack.c.b16 %v546, %v545
        %563 = vmatprep.subr.bf16.mxu0 0
        %564 = vmatpush1.bf16.msra.mxu0 %v547
        %565 = vmatprep.subr.bf16.mxu0 0
        %566 = vmatpush1.bf16.msra.mxu0 %v548
        %567 = vmatprep.subr.bf16.mxu0 0
        %568 = vmatpush1.bf16.msra.mxu0 %v549
        %569 = vmatprep.subr.bf16.mxu0 0
        %570 = vmatpush1.bf16.msra.mxu0 %v550
        %571 = vmatprep.subr.bf16.mxu0 0
        %572 = vmatpush1.bf16.msra.mxu0 %v551
        %573 = vmatprep.subr.bf16.mxu0 0
        %574 = vmatpush1.bf16.msra.mxu0 %v552
        %575 = vmatprep.subr.bf16.mxu0 0
        %576 = vmatpush1.bf16.msra.mxu0 %v553
        %577 = vmatprep.subr.bf16.mxu0 0
        %578 = vmatpush1.bf16.msra.mxu0 %v554
        %579 = vmatprep.subr.bf16.mxu0 0
        %580 = vmatpush1.bf16.msra.mxu0 0
        %581 = vmatprep.subr.bf16.mxu0 0
        %582 = vmatpush1.bf16.msra.mxu0 0
        %583 = vmatprep.subr.bf16.mxu0 0
        %584 = vmatpush1.bf16.msra.mxu0 0
        %585 = vmatprep.subr.bf16.mxu0 0
        %586 = vmatpush1.bf16.msra.mxu0 0
        %587 = vmatprep.subr.bf16.mxu0 0
        %588 = vmatpush1.bf16.msra.mxu0 0
        %589 = vmatprep.subr.bf16.mxu0 0
        %590 = vmatpush1.bf16.msra.mxu0 0
        %591 = vmatprep.subr.bf16.mxu0 0
        %592 = vmatpush1.bf16.msra.mxu0 0
        %593 = vmatprep.subr.bf16.mxu0 0
        %594 = vmatpush1.bf16.msra.mxu0 0
        %595 = vmatprep.mubr.bf16.mxu0 0
        %596 = vmatmul.mubr.bf16.gmra.mrb[0].mxu0 %v498
        %v597 = vpop.f32.mrb[0].mxu0
        %v598 = vadd.f32 0.0, %v597
        %v599 = vpop.f32.mrb[0].mxu0
        %v600 = vpop.f32.mrb[0].mxu0
        %v601 = vpop.f32.mrb[0].mxu0
        %602 = vdwg.mxu0
        %v603 = vadd.f32 %v497, %v598
        %604 = vst.msk [vmem:[%s408] sm:$0xff] %vm451, %v603
        // Predicated region
        $region73: #{rwkv_channel_mix.1} parent=43 // pred_check
          %p605 = pneg %p411
        $region74: #{rwkv_channel_mix.1} parent=43 // pred_check_branch
          %607 = sbr.rel (%p605) target = $region76
        $region75: #{rwkv_channel_mix.1} parent=43 // pred_region
          %v608 = vld [vmem:[%s362] sm:$0xf]
          %v609 = vunpack.c.l.bf16 %v608
          %v610 = vld [vmem:[%s408] sm:$0xff]
          %v611 = vmul.f32 %v609, %v610
          %612 = vst.msk [vmem:[%s408] sm:$0xff] %vm451, %v611
        $region76: #{rwkv_channel_mix.1} parent=43 // pred_fallthru
          _
        %s613 = sand.u32 %s201, 1
        %s614 = scalar_lea.sflag [#allocation5], %s613
        %s615 = sand.u32 %s201, 1
        %s616 = smul.addr %s615, 8
        %s617 = scalar_lea.vmem [#allocation14], %s616
        // Predicated region
        $region77: #{rwkv_channel_mix.1} parent=43 // pred_check
          %p618 = pneg %p211
        $region78: #{rwkv_channel_mix.1} parent=43 // pred_check_branch
          %620 = sbr.rel (%p618) target = $region80
        $region79: #{rwkv_channel_mix.1} parent=43 // pred_region
          %s622 = ssub.s32 128, 128
          %623 = vsyncadd %s614, %s622
          %s624 = smul.addr %s34, 128
          %s625 = scalar_lea.hbm %s6, %s624
          %s627 = sshll.u32 %s617, 4
          %s628 = int_to_ptr.vmem [resolvable:$true] %s627
          %630 = dma.vmem_to_hbm [thread:$0]  %s628, 128, %s625, %s614
        $region80: #{rwkv_channel_mix.1} parent=43 // pred_fallthru
          _
      $region44: #{rwkv_channel_mix.1} parent=5 // pred_fallthru
        _
      %p631 = scmp.le.s32.totalorder 2, %s25
      // Predicated region
      $region81: #{rwkv_channel_mix.1} parent=5 // pred_check
        %p632 = pneg %p631
      $region82: #{rwkv_channel_mix.1} parent=5 // pred_check_branch
        %634 = sbr.rel (%p632) target = $region84
      $region83: #{rwkv_channel_mix.1} parent=5 // pred_region
        %s635 = ssub.s32 %s25, 2
        // Predicated region
        $region85: #{rwkv_channel_mix.1} parent=83 // pred_check
          %p636 = pneg %p217
        $region86: #{rwkv_channel_mix.1} parent=83 // pred_check_branch
          %638 = sbr.rel (%p636) target = $region88
        $region87: #{rwkv_channel_mix.1} parent=83 // pred_region
          %s639 = sand.u32 %s202, 1
          %s640 = scalar_lea.sflag [#allocation5], %s639
          %s641 = sand.u32 %s202, 1
          %s642 = smul.addr %s641, 8
          %s643 = scalar_lea.vmem [#allocation14], %s642
          %644 = dma.done %s640, 128
        $region88: #{rwkv_channel_mix.1} parent=83 // pred_fallthru
          _
      $region84: #{rwkv_channel_mix.1} parent=5 // pred_fallthru
        _
    $region6: #{rwkv_channel_mix.1} parent=1 // loop_footer
      %s29 = sadd.s32 1, %s25
    $region7: #{rwkv_channel_mix.1} parent=1 // loop_footer_branch
      %24 = sbr.rel target = $region3
    $region8: #{rwkv_channel_mix.1} parent=1 // loop_exit
      _
    %645 = vsyncpa [#allocation4], 1
    %s646 = scalar_lea.sflag [#allocation4], 1
    %647 = vsyncpa %s646, 1
    %648 = vsyncpa [#allocation7], 1
    %s649 = scalar_lea.sflag [#allocation7], 1
    %650 = vsyncpa %s649, 1
    %651 = vsyncpa [#allocation10], 1
    %s652 = scalar_lea.sflag [#allocation10], 1
    %653 = vsyncpa %s652, 1
    %654 = vsyncpa [#allocation13], 1
    %655 = vsyncpa [#allocation5], 1
    %s656 = scalar_lea.sflag [#allocation5], 1
    %657 = vsyncpa %s656, 1

</llo_original>
